<compile_context>
chip_gen: v5e
topology: v5e:2x2
jax: 0.10.0
libtpu: 0.0.40
codegen_flags: <defaults>
</compile_context>

<pallas_src>
import jax
import jax.numpy as jnp
from jax.experimental import pallas as pl
from jax.experimental.pallas import tpu as pltpu

M, K, N = 128, 32, 8

_VMEM_SPEC = pl.BlockSpec(memory_space=pltpu.MemorySpace.VMEM)


def _linear_bias_add_kernel(x_ref, w_ref, b_ref, other_ref, o_ref):
    # MXU matmul (M,K)x(K,N) -> f32 accumulate, then f32 bias + other epilogue.
    acc = jnp.dot(x_ref[...], w_ref[...], preferred_element_type=jnp.float32)
    o_ref[...] = (acc + b_ref[...] + other_ref[...]).astype(o_ref.dtype)


def _linear_bias_kernel(x_ref, w_ref, b_ref, o_ref):
    acc = jnp.dot(x_ref[...], w_ref[...], preferred_element_type=jnp.float32)
    o_ref[...] = (acc + b_ref[...]).astype(o_ref.dtype)


def prepare_params(weight, bias):
    """One-time host-side parameter prep.

    weight: (N, K) f32 in PyTorch nn.Linear layout -> returns (K, N).
    bias:   (N,)   f32                             -> returns (1, N).
    """
    return jnp.asarray(weight).T, jnp.asarray(bias).reshape(1, N)


def model_forward(x1, w_t, b2d, other=None):
    """x1: (M, K) f32, w_t: (K, N) f32, b2d: (1, N) f32, other: (M, N) f32 or None."""
    if other is None:
        cost = pl.CostEstimate(
            flops=2 * M * K * N,
            transcendentals=0,
            bytes_accessed=(M * K + K * N + N + M * N) * 4,
        )
        return pl.pallas_call(
            _linear_bias_kernel,
            out_shape=jax.ShapeDtypeStruct((M, N), x1.dtype),
            in_specs=[_VMEM_SPEC, _VMEM_SPEC, _VMEM_SPEC],
            out_specs=_VMEM_SPEC,
            cost_estimate=cost,
        )(x1, w_t, b2d)

    cost = pl.CostEstimate(
        flops=2 * M * K * N,
        transcendentals=0,
        bytes_accessed=(M * K + K * N + N + 2 * M * N) * 4,
    )
    return pl.pallas_call(
        _linear_bias_add_kernel,
        out_shape=jax.ShapeDtypeStruct((M, N), x1.dtype),
        in_specs=[_VMEM_SPEC, _VMEM_SPEC, _VMEM_SPEC, _VMEM_SPEC],
        out_specs=_VMEM_SPEC,
        # Output written in place over `other`'s buffer (input index 3).
        input_output_aliases={3: 0},
        cost_estimate=cost,
    )(x1, w_t, b2d, other)


if __name__ == "__main__":
    key = jax.random.PRNGKey(0)
    kx, kw, kb, ko = jax.random.split(key, 4)

    # Deterministic synthetic inputs/parameters (not a checkpoint load).
    x1 = jax.random.normal(kx, (M, K), dtype=jnp.float32)
    # nn.Linear(32, 8): weight (8, 32), bias (8,) ~ U(-1/sqrt(32), 1/sqrt(32))
    bound = 1.0 / jnp.sqrt(jnp.float32(K))
    weight = jax.random.uniform(kw, (N, K), jnp.float32, -bound, bound)
    bias = jax.random.uniform(kb, (N,), jnp.float32, -bound, bound)
    other = jax.random.normal(ko, (M, N), dtype=jnp.float32)

    # One-time parameter prep (free: parameters are constants).
    w_t, b2d = prepare_params(weight, bias)

    # References computed BEFORE the aliased call so `other` is still live.
    ref = x1 @ weight.T + bias + other
    ref_none = x1 @ weight.T + bias

    # Path with `other` provided (output aliases `other`'s buffer).
    out = model_forward(x1, w_t, b2d, other)
    out = jax.block_until_ready(out)
    assert out.shape == (M, N)
    assert jnp.allclose(out, ref, atol=1e-5, rtol=1e-5)

    # Specialized `other is None` path (shape-compatible zeros semantics).
    out_none = model_forward(x1, w_t, b2d, None)
    out_none = jax.block_until_ready(out_none)
    assert out_none.shape == (M, N)
    assert jnp.allclose(out_none, ref_none, atol=1e-5, rtol=1e-5)

    print("KERNEL_OK")
</pallas_src>

<mosaic_0001>
module attributes {stable_mosaic.version = 11 : i64} {
  func.func @_linear_bias_add_kernel(%arg0: memref<128x32xf32, #tpu.memory_space<vmem>>, %arg1: memref<32x8xf32, #tpu.memory_space<vmem>>, %arg2: memref<1x8xf32, #tpu.memory_space<vmem>>, %arg3: memref<128x8xf32, #tpu.memory_space<vmem>>, %arg4: memref<128x8xf32, #tpu.memory_space<vmem>>) attributes {dimension_semantics = [], scalar_prefetch = 0 : i64, scratch_operands = 0 : i64, tpu.core_type = #tpu.core_type<tc>} {
    %c0 = arith.constant 0 : index
    %c0_0 = arith.constant 0 : index
    %0 = vector.load %arg0[%c0, %c0_0] : memref<128x32xf32, #tpu.memory_space<vmem>>, vector<128x32xf32>
    %c0_1 = arith.constant 0 : index
    %c0_2 = arith.constant 0 : index
    %1 = vector.load %arg1[%c0_1, %c0_2] : memref<32x8xf32, #tpu.memory_space<vmem>>, vector<32x8xf32>
    %cst = arith.constant dense<0.000000e+00> : vector<128x8xf32>
    %2 = tpu.matmul %0, %1, %cst {dimension_numbers = #tpu.dot_dimension_numbers<[1], [0], [0], [1], [0, 0, 1, 1], [], []>} : vector<128x32xf32>, vector<32x8xf32>, vector<128x8xf32> -> vector<128x8xf32>
    %c0_3 = arith.constant 0 : index
    %c0_4 = arith.constant 0 : index
    %3 = vector.load %arg2[%c0_3, %c0_4] : memref<1x8xf32, #tpu.memory_space<vmem>>, vector<1x8xf32>
    %4 = vector.broadcast %3 : vector<1x8xf32> to vector<128x8xf32>
    %5 = arith.addf %2, %4 : vector<128x8xf32>
    %c0_5 = arith.constant 0 : index
    %c0_6 = arith.constant 0 : index
    %6 = vector.load %arg3[%c0_5, %c0_6] : memref<128x8xf32, #tpu.memory_space<vmem>>, vector<128x8xf32>
    %7 = arith.addf %5, %6 : vector<128x8xf32>
    %c0_7 = arith.constant 0 : index
    %c0_8 = arith.constant 0 : index
    %8 = vector.load %arg4[%c0_7, %c0_8] : memref<128x8xf32, #tpu.memory_space<vmem>>, vector<128x8xf32>
    tpu.vector_store %arg4[%c0_7, %c0_8], %7 {strides = array<i32>} : memref<128x8xf32, #tpu.memory_space<vmem>>, vector<128x8xf32>,
    return
  }
}

</mosaic_0001>

<llo_original>
// kernel: tpu_custom_call.1
$region0: #{tpu_custom_call.1}
  #allocation0 [shape = 'u32[]', space=smem, size = 0x4, offset = 0x4, fixed_abs, tag = 'smem constant byte address 0x4 - core index']
  #allocation1 [shape = 'u32[72,128]{1,0:T(1,128)}', space=vmem, size = 0x9000, scoped, tag = 'internal scratch']
  %s0 = inlined_call_operand.vmem [shape: f32[128,32], index: 0, kind: input, shape index: {}]
  %s1 = inlined_call_operand.vmem [shape: f32[32,8], index: 1, kind: input, shape index: {}]
  %s2 = inlined_call_operand.vmem [shape: f32[1,8], index: 2, kind: input, shape index: {}]
  %s3 = inlined_call_operand.vmem [shape: f32[128,8], index: 3, kind: input, shape index: {}, may-alias: {3,4}]
  %s4 = inlined_call_operand.vmem [shape: f32[128,8], index: 4, kind: output, shape index: {}, may-alias: {3,4}]
  %s5 = sld [smem:[#allocation0]]
  $region26: #{tpu_custom_call.1} parent=0
    _
  %s7 = ssub.s32 1, %s5
  %s8 = scalar_select 0, %s7, %s5
  // Predicated region
  $region2: #{tpu_custom_call.1} parent=0 // pred_check
    _
  $region3: #{tpu_custom_call.1} parent=0 // pred_check_branch
    %10 = sbr.rel (0) target = $region5
  $region4: #{tpu_custom_call.1} parent=0 // pred_region
    _
  $region5: #{tpu_custom_call.1} parent=0 // pred_fallthru
    _
  // Predicated region
  $region6: #{tpu_custom_call.1} parent=0 // pred_check
    _
  $region7: #{tpu_custom_call.1} parent=0 // pred_check_branch
    %12 = sbr.rel (0) target = $region9
  $region8: #{tpu_custom_call.1} parent=0 // pred_region
    _
  $region9: #{tpu_custom_call.1} parent=0 // pred_fallthru
    _
  // Predicated region
  $region10: #{tpu_custom_call.1} parent=0 // pred_check
    _
  $region11: #{tpu_custom_call.1} parent=0 // pred_check_branch
    %14 = sbr.rel (0) target = $region13
  $region12: #{tpu_custom_call.1} parent=0 // pred_region
    _
  $region13: #{tpu_custom_call.1} parent=0 // pred_fallthru
    _
  // Predicated region
  $region14: #{tpu_custom_call.1} parent=0 // pred_check
    _
  $region15: #{tpu_custom_call.1} parent=0 // pred_check_branch
    %16 = sbr.rel (0) target = $region17
  $region16: #{tpu_custom_call.1} parent=0 // pred_region
    _
  $region17: #{tpu_custom_call.1} parent=0 // pred_fallthru
    _
  %v17 = vld [vmem:[%s0] sm:$0xff]
  %v18 = vld [vmem:[%s0 + $0x8] sm:$0xff]
  %v19 = vld [vmem:[%s0 + $0x10] sm:$0xff]
  %v20 = vld [vmem:[%s0 + $0x18] sm:$0xff]
  %v21 = vld [vmem:[%s0 + $0x20] sm:$0xff]
  %v22 = vld [vmem:[%s0 + $0x28] sm:$0xff]
  %v23 = vld [vmem:[%s0 + $0x30] sm:$0xff]
  %v24 = vld [vmem:[%s0 + $0x38] sm:$0xff]
  %v25 = vld [vmem:[%s0 + $0x40] sm:$0xff]
  %v26 = vld [vmem:[%s0 + $0x48] sm:$0xff]
  %v27 = vld [vmem:[%s0 + $0x50] sm:$0xff]
  %v28 = vld [vmem:[%s0 + $0x58] sm:$0xff]
  %v29 = vld [vmem:[%s0 + $0x60] sm:$0xff]
  %v30 = vld [vmem:[%s0 + $0x68] sm:$0xff]
  %v31 = vld [vmem:[%s0 + $0x70] sm:$0xff]
  %v32 = vld [vmem:[%s0 + $0x78] sm:$0xff]
  %v33 = vld [vmem:[%s1] sm:$0xff]
  %v34 = vld [vmem:[%s1 + $0x8] sm:$0xff]
  %v35 = vld [vmem:[%s1 + $0x10] sm:$0xff]
  %v36 = vld [vmem:[%s1 + $0x18] sm:$0xff]
  %v37 = vld [vmem:[%s2] sm:$0x1]
  %v39 = vperm.slane %v37, 0
  %vm41 = vcmask 261120
  %v43 = vsel %vm41, %v17, 0
  %v46 = vsel %vm41, %v18, 0
  %v49 = vsel %vm41, %v19, 0
  %v52 = vsel %vm41, %v20, 0
  %v55 = vsel %vm41, %v21, 0
  %v58 = vsel %vm41, %v22, 0
  %v61 = vsel %vm41, %v23, 0
  %v64 = vsel %vm41, %v24, 0
  %v67 = vsel %vm41, %v25, 0
  %v70 = vsel %vm41, %v26, 0
  %v73 = vsel %vm41, %v27, 0
  %v76 = vsel %vm41, %v28, 0
  %v79 = vsel %vm41, %v29, 0
  %v82 = vsel %vm41, %v30, 0
  %v85 = vsel %vm41, %v31, 0
  %v88 = vsel %vm41, %v32, 0
  %90 = vmatpush.msra.mxu0 0.0
  %91 = vmatpush.msra.mxu0 0.0
  %92 = vmatpush.msra.mxu0 0.0
  %93 = vmatpush.msra.mxu0 0.0
  %94 = vmatpush.msra.mxu0 0.0
  %95 = vmatpush.msra.mxu0 0.0
  %96 = vmatpush.msra.mxu0 0.0
  %97 = vmatpush.msra.mxu0 0.0
  %98 = vmatpush.msra.mxu0 0.0
  %99 = vmatpush.msra.mxu0 0.0
  %100 = vmatpush.msra.mxu0 0.0
  %101 = vmatpush.msra.mxu0 0.0
  %102 = vmatpush.msra.mxu0 %v36
  %103 = vmatpush.msra.mxu0 %v35
  %104 = vmatpush.msra.mxu0 %v34
  %105 = vmatpush.msra.mxu0 %v33
  %106 = vmatmul.f32.gmra.mxu0 %v43
  %v107 = vpop.f32.mrf.mxu0
  %v108 = vadd.f32 %v39, %v107
  %109 = vmatmul.f32.gmra.mxu0 %v46
  %v110 = vpop.f32.mrf.mxu0
  %v111 = vadd.f32 %v39, %v110
  %112 = vmatmul.f32.gmra.mxu0 %v49
  %v113 = vpop.f32.mrf.mxu0
  %v114 = vadd.f32 %v39, %v113
  %115 = vmatmul.f32.gmra.mxu0 %v52
  %v116 = vpop.f32.mrf.mxu0
  %v117 = vadd.f32 %v39, %v116
  %118 = vmatmul.f32.gmra.mxu0 %v55
  %v119 = vpop.f32.mrf.mxu0
  %v120 = vadd.f32 %v39, %v119
  %121 = vmatmul.f32.gmra.mxu0 %v58
  %v122 = vpop.f32.mrf.mxu0
  %v123 = vadd.f32 %v39, %v122
  %124 = vmatmul.f32.gmra.mxu0 %v61
  %v125 = vpop.f32.mrf.mxu0
  %v126 = vadd.f32 %v39, %v125
  %127 = vmatmul.f32.gmra.mxu0 %v64
  %v128 = vpop.f32.mrf.mxu0
  %v129 = vadd.f32 %v39, %v128
  %130 = vmatmul.f32.gmra.mxu0 %v67
  %v131 = vpop.f32.mrf.mxu0
  %v132 = vadd.f32 %v39, %v131
  %133 = vmatmul.f32.gmra.mxu0 %v70
  %v134 = vpop.f32.mrf.mxu0
  %v135 = vadd.f32 %v39, %v134
  %136 = vmatmul.f32.gmra.mxu0 %v73
  %v137 = vpop.f32.mrf.mxu0
  %v138 = vadd.f32 %v39, %v137
  %139 = vmatmul.f32.gmra.mxu0 %v76
  %v140 = vpop.f32.mrf.mxu0
  %v141 = vadd.f32 %v39, %v140
  %142 = vmatmul.f32.gmra.mxu0 %v79
  %v143 = vpop.f32.mrf.mxu0
  %v144 = vadd.f32 %v39, %v143
  %145 = vmatmul.f32.gmra.mxu0 %v82
  %v146 = vpop.f32.mrf.mxu0
  %v147 = vadd.f32 %v39, %v146
  %148 = vmatmul.f32.gmra.mxu0 %v85
  %v149 = vpop.f32.mrf.mxu0
  %v150 = vadd.f32 %v39, %v149
  %151 = vmatmul.f32.gmra.mxu0 %v88
  %v152 = vpop.f32.mrf.mxu0
  %v153 = vadd.f32 %v39, %v152
  %154 = vdwg.mxu0
  %v155 = vld [vmem:[%s3] sm:$0xff]
  %v156 = vld [vmem:[%s3 + $0x8] sm:$0xff]
  %v157 = vld [vmem:[%s3 + $0x10] sm:$0xff]
  %v158 = vld [vmem:[%s3 + $0x18] sm:$0xff]
  %v159 = vld [vmem:[%s3 + $0x20] sm:$0xff]
  %v160 = vld [vmem:[%s3 + $0x28] sm:$0xff]
  %v161 = vld [vmem:[%s3 + $0x30] sm:$0xff]
  %v162 = vld [vmem:[%s3 + $0x38] sm:$0xff]
  %v163 = vld [vmem:[%s3 + $0x40] sm:$0xff]
  %v164 = vld [vmem:[%s3 + $0x48] sm:$0xff]
  %v165 = vld [vmem:[%s3 + $0x50] sm:$0xff]
  %v166 = vld [vmem:[%s3 + $0x58] sm:$0xff]
  %v167 = vld [vmem:[%s3 + $0x60] sm:$0xff]
  %v168 = vld [vmem:[%s3 + $0x68] sm:$0xff]
  %v169 = vld [vmem:[%s3 + $0x70] sm:$0xff]
  %v170 = vld [vmem:[%s3 + $0x78] sm:$0xff]
  %v171 = vadd.f32 %v108, %v155
  %v172 = vadd.f32 %v111, %v156
  %v173 = vadd.f32 %v114, %v157
  %v174 = vadd.f32 %v117, %v158
  %v175 = vadd.f32 %v120, %v159
  %v176 = vadd.f32 %v123, %v160
  %v177 = vadd.f32 %v126, %v161
  %v178 = vadd.f32 %v129, %v162
  %v179 = vadd.f32 %v132, %v163
  %v180 = vadd.f32 %v135, %v164
  %v181 = vadd.f32 %v138, %v165
  %v182 = vadd.f32 %v141, %v166
  %v183 = vadd.f32 %v144, %v167
  %v184 = vadd.f32 %v147, %v168
  %v185 = vadd.f32 %v150, %v169
  %v186 = vadd.f32 %v153, %v170
  %vm187 = vcmask 64512
  %188 = vst.msk [vmem:[%s4] sm:$0xff] %vm187, %v171
  %189 = vst.msk [vmem:[%s4 + $0x8] sm:$0xff] %vm187, %v172
  %190 = vst.msk [vmem:[%s4 + $0x10] sm:$0xff] %vm187, %v173
  %191 = vst.msk [vmem:[%s4 + $0x18] sm:$0xff] %vm187, %v174
  %192 = vst.msk [vmem:[%s4 + $0x20] sm:$0xff] %vm187, %v175
  %193 = vst.msk [vmem:[%s4 + $0x28] sm:$0xff] %vm187, %v176
  %194 = vst.msk [vmem:[%s4 + $0x30] sm:$0xff] %vm187, %v177
  %195 = vst.msk [vmem:[%s4 + $0x38] sm:$0xff] %vm187, %v178
  %196 = vst.msk [vmem:[%s4 + $0x40] sm:$0xff] %vm187, %v179
  %197 = vst.msk [vmem:[%s4 + $0x48] sm:$0xff] %vm187, %v180
  %198 = vst.msk [vmem:[%s4 + $0x50] sm:$0xff] %vm187, %v181
  %199 = vst.msk [vmem:[%s4 + $0x58] sm:$0xff] %vm187, %v182
  %200 = vst.msk [vmem:[%s4 + $0x60] sm:$0xff] %vm187, %v183
  %201 = vst.msk [vmem:[%s4 + $0x68] sm:$0xff] %vm187, %v184
  %202 = vst.msk [vmem:[%s4 + $0x70] sm:$0xff] %vm187, %v185
  %203 = vst.msk [vmem:[%s4 + $0x78] sm:$0xff] %vm187, %v186
  // Predicated region
  $region18: #{tpu_custom_call.1} parent=0 // pred_check
    _
  $region19: #{tpu_custom_call.1} parent=0 // pred_check_branch
    %205 = sbr.rel (0) target = $region21
  $region20: #{tpu_custom_call.1} parent=0 // pred_region
    _
  $region21: #{tpu_custom_call.1} parent=0 // pred_fallthru
    _
  // Predicated region
  $region22: #{tpu_custom_call.1} parent=0 // pred_check
    _
  $region23: #{tpu_custom_call.1} parent=0 // pred_check_branch
    %207 = sbr.rel (0) target = $region25
  $region24: #{tpu_custom_call.1} parent=0 // pred_region
    _
  $region25: #{tpu_custom_call.1} parent=0 // pred_fallthru
    _

</llo_original>
